<compile_context>
chip_gen: v7x
topology: tpu7x:2x2x1
jax: 0.10.0
libtpu: 0.0.40
codegen_flags: <defaults>
</compile_context>

<pallas_src>
import functools
import math

import jax
import jax.numpy as jnp
from jax import lax
from jax.experimental import pallas as pl
from jax.experimental.pallas import tpu as pltpu


# ----------------------------------------------------------------------------
# Buffer construction — deterministic, matches torch __init__.
# ----------------------------------------------------------------------------
def make_positional_encoding(d_model: int, max_len: int = 5000) -> jax.Array:
    position = jnp.arange(0, max_len, dtype=jnp.float32)[:, None]            # (L, 1)
    div_term = jnp.exp(
        jnp.arange(0, d_model, 2, dtype=jnp.float32) * (-math.log(10000.0) / d_model)
    )                                                                         # (D/2,)
    pe = jnp.zeros((max_len, d_model), dtype=jnp.float32)
    pe = pe.at[:, 0::2].set(jnp.sin(position * div_term))
    pe = pe.at[:, 1::2].set(jnp.cos(position * div_term))
    return pe                                                                 # (L, D)


# ----------------------------------------------------------------------------
# Kernels
#   3-D layout : x_ref (ts, B, D),   pe_ref (ts, 1, D)  -> broadcast add
#   2-D layout : x_ref (ts, B*D),    pe_ref (ts, D)     -> jnp.tile(pe, B)
# ----------------------------------------------------------------------------
def _broadcast_pe(pe_ref, x_ref, lane_tile):
    pe = pe_ref[...].astype(x_ref.dtype)
    if lane_tile is not None and lane_tile > 1:
        pe = jnp.tile(pe, (1, lane_tile))
    return pe


def _pe_add_kernel(x_ref, pe_ref, o_ref, *, lane_tile):
    o_ref[...] = x_ref[...] + _broadcast_pe(pe_ref, x_ref, lane_tile)


def _uniform_01(shape, seed_u32, program_id):
    """Counter-based hash PRNG (splitmix32-style). Plain integer VPU ops only,
    so it lowers on TPU (Mosaic) and in interpret mode alike."""
    strides = pl.strides_from_shape(shape)
    lin = jnp.zeros(shape, dtype=jnp.uint32)
    for ax, st in enumerate(strides):
        lin = lin + lax.broadcasted_iota(jnp.int32, shape, ax).astype(jnp.uint32) * jnp.uint32(st)
    tile_elems = jnp.uint32(math.prod(shape))
    ctr = lin + tile_elems * program_id.astype(jnp.uint32)
    h = ctr ^ (seed_u32 * jnp.uint32(0x9E3779B9) + jnp.uint32(0x85EBCA6B))
    h = (h ^ (h >> jnp.uint32(16))) * jnp.uint32(0x7FEB352D)
    h = (h ^ (h >> jnp.uint32(15))) * jnp.uint32(0x846CA68B)
    h = h ^ (h >> jnp.uint32(16))
    # top 23 bits -> uniform in [0, 1); go via int32 (always-supported convert).
    return (h >> jnp.uint32(9)).astype(jnp.int32).astype(jnp.float32) * jnp.float32(1.0 / (1 << 23))


def _pe_add_dropout_kernel(seed_ref, x_ref, pe_ref, o_ref, *, lane_tile, p):
    val = x_ref[...] + _broadcast_pe(pe_ref, x_ref, lane_tile)
    u = _uniform_01(val.shape, seed_ref[0].astype(jnp.uint32), pl.program_id(0))
    keep = u >= jnp.float32(p)                       # P(keep) = 1 - p
    scale = jnp.asarray(1.0 / (1.0 - p), dtype=val.dtype)
    o_ref[...] = jnp.where(keep, val * scale, jnp.zeros_like(val))


# ----------------------------------------------------------------------------
# Tile sizing: ~2 MiB of x per tile buffer, >= ~8 grid steps when possible.
# ----------------------------------------------------------------------------
def _choose_ts(S: int, row_bytes: int, itemsize: int) -> int:
    sub = 8 if itemsize >= 4 else 16                 # sublane pack (f32 / bf16)
    target = 2 * 1024 * 1024                         # ~2 MiB already hits ~85% HBM roofline
    ts = max(sub, (target // max(1, row_bytes)) // sub * sub)
    cap = -(-S // 8)                                 # keep >= ~8 steps (>= 2 per v7x core)
    cap = max(sub, -(-cap // sub) * sub)
    ts = min(ts, cap)
    if ts >= S:
        return S                                     # single block == full sequence
    return ts


# ----------------------------------------------------------------------------
# Forward wrapper: out = dropout(x + pe[:S])   (dropout identity in eval mode)
# ----------------------------------------------------------------------------
def positional_encoding_forward(
    x: jax.Array,                 # (S, B, D), float32 or bfloat16
    pe: jax.Array,                # (max_len, D), float32
    *,
    p: float = 0.1,
    training: bool = False,
    seed: int = 0,
    ts: int | None = None,
    donate_x: bool = False,       # only alias x->out if the caller really donates x
) -> jax.Array:
    S, B, D = x.shape
    out_dtype = x.dtype
    max_len = pe.shape[0]
    assert S <= max_len, "sequence longer than positional-encoding buffer"

    apply_dropout = bool(training) and p > 0.0
    if apply_dropout and p >= 1.0:
        return jnp.zeros_like(x)                     # torch Dropout(p=1) zeroes everything

    # Cast pe once to x's dtype (bf16 add stays bf16 on v6e/v7x; f32 is a no-op).
    # TODO(synk): PyTorch type promotion (bf16 x + f32 pe) would return f32; we keep x.dtype.
    pe_c = pe.astype(out_dtype)

    itemsize = jnp.dtype(out_dtype).itemsize
    if ts is None:
        ts = _choose_ts(S, B * D * itemsize, itemsize)
    grid = (pl.cdiv(S, ts),)                         # ragged edge block handled by Pallas clipping
    cparams = pltpu.CompilerParams(dimension_semantics=("parallel",))

    use_3d = (D % 128 == 0)
    if use_3d:
        # Lane axis = D (multiple of 128): unmasked stores, sublane broadcast of pe.
        x_in, pe_in = x, pe_c.reshape(max_len, 1, D)
        x_block, pe_block = (ts, B, D), (ts, 1, D)
        out_shape = jax.ShapeDtypeStruct((S, B, D), out_dtype)
        lane_tile = None
        idx = lambda i: (i, 0, 0)
        idx_s = lambda i, s: (i, 0, 0)
    else:
        # Collapse (B, D) to one trailing axis (lane-dense when B*D % 128 == 0);
        # replicate the tiny pe tile in-kernel.
        x_in, pe_in = x.reshape(S, B * D), pe_c
        x_block, pe_block = (ts, B * D), (ts, D)
        out_shape = jax.ShapeDtypeStruct((S, B * D), out_dtype)
        lane_tile = B
        idx = lambda i: (i, 0)
        idx_s = lambda i, s: (i, 0)

    if not apply_dropout:
        out = pl.pallas_call(
            functools.partial(_pe_add_kernel, lane_tile=lane_tile),
            out_shape=out_shape,
            grid_spec=pl.GridSpec(
                grid=grid,
                in_specs=[pl.BlockSpec(x_block, idx),
                          pl.BlockSpec(pe_block, idx)],
                out_specs=pl.BlockSpec(x_block, idx),
            ),
            input_output_aliases=({0: 0} if donate_x else {}),
            compiler_params=cparams,
        )(x_in, pe_in)
    else:
        seed_arr = jnp.asarray([seed], dtype=jnp.int32)
        out = pl.pallas_call(
            functools.partial(_pe_add_dropout_kernel, lane_tile=lane_tile, p=float(p)),
            out_shape=out_shape,
            grid_spec=pltpu.PrefetchScalarGridSpec(
                num_scalar_prefetch=1,               # seed lands in SMEM
                grid=grid,
                in_specs=[pl.BlockSpec(x_block, idx_s),
                          pl.BlockSpec(pe_block, idx_s)],
                out_specs=pl.BlockSpec(x_block, idx_s),
            ),
            input_output_aliases=({1: 0} if donate_x else {}),   # seed is input 0
            compiler_params=cparams,
        )(seed_arr, x_in, pe_in)

    return out if use_3d else out.reshape(S, B, D)


if __name__ == "__main__":
    # Case 1: eval mode, D < 128 -> collapsed lane-dense layout (B*D = 128).
    d_model, max_len = 32, 64
    pe = make_positional_encoding(d_model, max_len)
    seq, batch = 16, 4
    x = jax.random.normal(jax.random.PRNGKey(0), (seq, batch, d_model), dtype=jnp.float32)
    fwd_eval = jax.jit(functools.partial(positional_encoding_forward, p=0.1, training=False))
    out = jax.block_until_ready(fwd_eval(x, pe))
    ref = x + pe[:seq][:, None, :]
    assert out.shape == (seq, batch, d_model)
    assert jnp.allclose(out, ref, atol=1e-6, rtol=1e-6)

    # Case 2: sequence not divisible by the tile -> ragged edge block (no pad/slice).
    seq2, batch2 = 12, 2
    xb = jax.random.normal(jax.random.PRNGKey(1), (seq2, batch2, d_model), dtype=jnp.float32)
    out_b = jax.block_until_ready(fwd_eval(xb, pe))
    ref_b = xb + pe[:seq2][:, None, :]
    assert out_b.shape == (seq2, batch2, d_model)
    assert jnp.allclose(out_b, ref_b, atol=1e-6, rtol=1e-6)

    # Case 3: D % 128 == 0 -> 3-D layout with sublane broadcast of pe.
    d3, len3 = 128, 32
    pe3 = make_positional_encoding(d3, len3)
    x3 = jax.random.normal(jax.random.PRNGKey(2), (16, 2, d3), dtype=jnp.float32)
    out3 = jax.block_until_ready(fwd_eval(x3, pe3))
    ref3 = x3 + pe3[:16][:, None, :]
    assert out3.shape == (16, 2, d3)
    assert jnp.allclose(out3, ref3, atol=1e-6, rtol=1e-6)

    # Case 4: training mode (inverted dropout via in-kernel counter-hash PRNG).
    p = 0.1
    fwd_train = jax.jit(
        functools.partial(positional_encoding_forward, p=p, training=True, seed=42)
    )
    out_t = jax.block_until_ready(fwd_train(x, pe))
    assert out_t.shape == (seq, batch, d_model)
    assert bool(jnp.all(jnp.isfinite(out_t)))
    scaled = ref / (1.0 - p)
    is_zero = out_t == 0.0
    matches = jnp.isclose(out_t, scaled, atol=1e-5, rtol=1e-5)
    assert bool(jnp.all(is_zero | matches))          # every element dropped or scaled
    assert bool(jnp.any(is_zero)) and bool(jnp.any(~is_zero))

    print("KERNEL_OK")
</pallas_src>

<mosaic_0001>
module attributes {stable_mosaic.version = 11 : i64} {
  func.func @_pe_add_kernel(%arg0: i32, %arg1: memref<8x128xf32, #tpu.memory_space<vmem>>, %arg2: memref<8x32xf32, #tpu.memory_space<vmem>>, %arg3: memref<8x128xf32, #tpu.memory_space<vmem>>) attributes {dimension_semantics = [#tpu.dimension_semantics<parallel>], iteration_bounds = array<i64: 2>, scalar_prefetch = 0 : i64, scratch_operands = 0 : i64, tpu.core_type = #tpu.core_type<tc>, window_params = [{transform_indices = @transform_0, window_bounds = array<i64: 8, 128>}, {transform_indices = @transform_1, window_bounds = array<i64: 8, 32>}, {transform_indices = @transform_2, window_bounds = array<i64: 8, 128>}]} {
    %c0 = arith.constant 0 : index
    %c0_0 = arith.constant 0 : index
    %0 = vector.load %arg1[%c0, %c0_0] : memref<8x128xf32, #tpu.memory_space<vmem>>, vector<8x128xf32>
    %c0_1 = arith.constant 0 : index
    %c0_2 = arith.constant 0 : index
    %1 = vector.load %arg2[%c0_1, %c0_2] : memref<8x32xf32, #tpu.memory_space<vmem>>, vector<8x32xf32>
    %2 = tpu.concatenate %1, %1, %1, %1 in 1 : vector<8x32xf32>, vector<8x32xf32>, vector<8x32xf32>, vector<8x32xf32> -> vector<8x128xf32>
    %3 = arith.addf %0, %2 : vector<8x128xf32>
    %c0_3 = arith.constant 0 : index
    %c0_4 = arith.constant 0 : index
    %4 = vector.load %arg3[%c0_3, %c0_4] : memref<8x128xf32, #tpu.memory_space<vmem>>, vector<8x128xf32>
    tpu.vector_store %arg3[%c0_3, %c0_4], %3 {strides = array<i32>} : memref<8x128xf32, #tpu.memory_space<vmem>>, vector<8x128xf32>,
    return
  }
  func.func @transform_0(%arg0: i32) -> (i32, i32) {
    %c0_i32 = arith.constant 0 : i32
    %c0_i32_0 = arith.constant 0 : i32
    return %arg0, %c0_i32 : i32, i32
  }
  func.func @transform_1(%arg0: i32) -> (i32, i32) {
    %c0_i32 = arith.constant 0 : i32
    %c0_i32_0 = arith.constant 0 : i32
    return %arg0, %c0_i32 : i32, i32
  }
  func.func @transform_2(%arg0: i32) -> (i32, i32) {
    %c0_i32 = arith.constant 0 : i32
    %c0_i32_0 = arith.constant 0 : i32
    return %arg0, %c0_i32 : i32, i32
  }
}

</mosaic_0001>

<llo_original>
// kernel: positional_encoding_forward.1
$region0: #{positional_encoding_forward.1}
  #allocation0 [shape = 'u32[]', space=smem, size = 0x4, offset = 0x4, fixed_abs, tag = 'smem constant byte address 0x4 - core index']
  #allocation1 [shape = 'u32[144,128]{1,0:T(1,128)}', space=vmem, size = 0x12000, scoped, tag = 'internal scratch']
  %s0 = inlined_call_operand.vmem [shape: f32[16,128], index: 0, kind: input, shape index: {}]
  %s1 = inlined_call_operand.vmem [shape: f32[64,32], index: 1, kind: input, shape index: {}]
  %s2 = inlined_call_operand.vmem [shape: f32[16,128], index: 2, kind: output, shape index: {}]
  %s3 = sld [smem:[#allocation0]]
  $region41: #{positional_encoding_forward.1} parent=0
    _
  %s5 = ssub.s32 1, %s3
  %s6 = scalar_select 0, %s5, %s3
  loop: start=0, step=1, limit=4
  $region2: #{positional_encoding_forward.1} parent=0 // loop_pre_header
    _
  $region3: #{positional_encoding_forward.1} parent=0 // loop_header
    %s8 = sphi 0, %s12
    %p9 = scmp.ge.s32.totalorder %s8, 4
    %s18 = sphi 0, %s20
    %s21 = sphi 0, %s18
    %s22 = sphi 0, %s21
    %s38 = sphi 0, %s22
    %s44 = sphi 0, %s46
    %s47 = sphi 0, %s44
    %s48 = sphi 0, %s47
    %s64 = sphi 0, %s48
    %s70 = sphi 0, %s72
    %s73 = sphi 0, %s70
    %s74 = sphi 0, %s73
    %s90 = sphi 0, %s74
  $region4: #{positional_encoding_forward.1} parent=0 // loop_header_branch
    %11 = sbr.rel (%p9) target = $region8
  $region5: #{positional_encoding_forward.1} parent=0 // loop_body
    %s13 = ssub.s32 %s8, 1
    %s14 = ssub.s32 %s8, 2
    %s15 = sadd.s32 %s8, 1
    %s16 = ssub.s32 %s8, %s15
    %p17 = scmp.eq.s32.totalorder %s16, 0
    %s19 = sadd.s32 %s18, 1
    %s20 = scalar_select %p17, %s18, %s19
    %p23 = pneg %p17
    %p24 = scmp.eq.s32.totalorder %s8, 1
    %p25 = por %p23, %p24
    %p26 = scmp.ne.s32.totalorder %s18, %s21
    %p27 = scmp.eq.s32.totalorder %s8, 0
    %p28 = por %p26, %p27
    %p29 = scmp.ne.s32.totalorder %s18, %s21
    %p30 = scmp.eq.s32.totalorder %s13, 1
    %p31 = por %p29, %p30
    %p32 = scmp.ne.s32.totalorder %s21, %s22
    %p33 = scmp.eq.s32.totalorder %s13, 0
    %p34 = por %p32, %p33
    %p35 = scmp.ne.s32.totalorder %s21, %s22
    %p36 = scmp.eq.s32.totalorder %s14, 1
    %p37 = por %p35, %p36
    %p39 = scmp.ne.s32.totalorder %s22, %s38
    %p40 = scmp.eq.s32.totalorder %s14, 0
    %p41 = por %p39, %p40
    %s42 = ssub.s32 %s8, %s15
    %p43 = scmp.eq.s32.totalorder %s42, 0
    %s45 = sadd.s32 %s44, 1
    %s46 = scalar_select %p43, %s44, %s45
    %p49 = pneg %p43
    %p50 = scmp.eq.s32.totalorder %s8, 1
    %p51 = por %p49, %p50
    %p52 = scmp.ne.s32.totalorder %s44, %s47
    %p53 = scmp.eq.s32.totalorder %s8, 0
    %p54 = por %p52, %p53
    %p55 = scmp.ne.s32.totalorder %s44, %s47
    %p56 = scmp.eq.s32.totalorder %s13, 1
    %p57 = por %p55, %p56
    %p58 = scmp.ne.s32.totalorder %s47, %s48
    %p59 = scmp.eq.s32.totalorder %s13, 0
    %p60 = por %p58, %p59
    %p61 = scmp.ne.s32.totalorder %s47, %s48
    %p62 = scmp.eq.s32.totalorder %s14, 1
    %p63 = por %p61, %p62
    %p65 = scmp.ne.s32.totalorder %s48, %s64
    %p66 = scmp.eq.s32.totalorder %s14, 0
    %p67 = por %p65, %p66
    %s68 = ssub.s32 %s8, %s15
    %p69 = scmp.eq.s32.totalorder %s68, 0
    %s71 = sadd.s32 %s70, 1
    %s72 = scalar_select %p69, %s70, %s71
    %p75 = pneg %p69
    %p76 = scmp.eq.s32.totalorder %s8, 1
    %p77 = por %p75, %p76
    %p78 = scmp.ne.s32.totalorder %s70, %s73
    %p79 = scmp.eq.s32.totalorder %s8, 0
    %p80 = por %p78, %p79
    %p81 = scmp.ne.s32.totalorder %s70, %s73
    %p82 = scmp.eq.s32.totalorder %s13, 1
    %p83 = por %p81, %p82
    %p84 = scmp.ne.s32.totalorder %s73, %s74
    %p85 = scmp.eq.s32.totalorder %s13, 0
    %p86 = por %p84, %p85
    %p87 = scmp.ne.s32.totalorder %s73, %s74
    %p88 = scmp.eq.s32.totalorder %s14, 1
    %p89 = por %p87, %p88
    %p91 = scmp.ne.s32.totalorder %s74, %s90
    %p92 = scmp.eq.s32.totalorder %s14, 0
    %p93 = por %p91, %p92
    %p94 = scmp.le.s32.totalorder 1, %s8
    %p95 = scmp.lt.s32.totalorder %s8, 3
    %p96 = pnand %p94, %p95
    %p97 = pneg %p96
    // Predicated region
    $region9: #{positional_encoding_forward.1} parent=5 // pred_check
      _
    $region10: #{positional_encoding_forward.1} parent=5 // pred_check_branch
      %99 = sbr.rel (%p96) target = $region12
    $region11: #{positional_encoding_forward.1} parent=5 // pred_region
      %s100 = ssub.s32 %s8, 1
    $region12: #{positional_encoding_forward.1} parent=5 // pred_fallthru
      _
    %p101 = scmp.lt.s32.totalorder %s8, 2
    // Predicated region
    $region13: #{positional_encoding_forward.1} parent=5 // pred_check
      %p102 = pneg %p101
    $region14: #{positional_encoding_forward.1} parent=5 // pred_check_branch
      %104 = sbr.rel (%p102) target = $region16
    $region15: #{positional_encoding_forward.1} parent=5 // pred_region
      // Predicated region
      $region17: #{positional_encoding_forward.1} parent=15 // pred_check
        %p105 = pneg %p28
      $region18: #{positional_encoding_forward.1} parent=15 // pred_check_branch
        %107 = sbr.rel (%p105) target = $region20
      $region19: #{positional_encoding_forward.1} parent=15 // pred_region
        %p108 = scmp.lt.s32.totalorder %s8, 1
        %s109 = scalar_select %p108, %s8, 1
        %s110 = smul.addr %s109, 8
        %s111 = scalar_lea.vmem %s0, %s110
      $region20: #{positional_encoding_forward.1} parent=15 // pred_fallthru
        _
      // Predicated region
      $region21: #{positional_encoding_forward.1} parent=15 // pred_check
        %p112 = pneg %p54
      $region22: #{positional_encoding_forward.1} parent=15 // pred_check_branch
        %114 = sbr.rel (%p112) target = $region24
      $region23: #{positional_encoding_forward.1} parent=15 // pred_region
        %p115 = scmp.lt.s32.totalorder %s8, 7
        %s116 = scalar_select %p115, %s8, 7
        %s117 = smul.addr %s116, 8
        %s118 = scalar_lea.vmem %s1, %s117
      $region24: #{positional_encoding_forward.1} parent=15 // pred_fallthru
        _
    $region16: #{positional_encoding_forward.1} parent=5 // pred_fallthru
      _
    %p119 = scmp.le.s32.totalorder 1, %s8
    %p120 = scmp.lt.s32.totalorder %s8, 3
    %p121 = pnand %p119, %p120
    %p122 = pneg %p121
    // Predicated region
    $region25: #{positional_encoding_forward.1} parent=5 // pred_check
      _
    $region26: #{positional_encoding_forward.1} parent=5 // pred_check_branch
      %124 = sbr.rel (%p121) target = $region28
    $region27: #{positional_encoding_forward.1} parent=5 // pred_region
      %s125 = ssub.s32 %s8, 1
      %p126 = scmp.lt.s32.totalorder %s13, 1
      %s127 = scalar_select %p126, %s13, 1
      %s128 = smul.addr %s127, 8
      %s129 = scalar_lea.vmem %s0, %s128
      %p130 = pneg %p34
      %p131 = pneg %p31
      %p132 = scmp.lt.s32.totalorder %s13, 7
      %s133 = scalar_select %p132, %s13, 7
      %s134 = smul.addr %s133, 8
      %s135 = scalar_lea.vmem %s1, %s134
      %p136 = pneg %p60
      %p137 = pneg %p57
      %p138 = pneg %p86
      %p139 = pneg %p83
      %p140 = scmp.lt.s32.totalorder %s13, 1
      %s141 = scalar_select %p140, %s13, 1
      %s142 = smul.addr %s141, 8
      %s143 = scalar_lea.vmem %s2, %s142
      %p144 = scmp.lt.s32.totalorder %s13, 1
      %s145 = scalar_select %p144, %s13, 1
      %s146 = smul.addr %s145, 8
      %s147 = scalar_lea.vmem %s0, %s146
      %p148 = scmp.lt.s32.totalorder %s13, 7
      %s149 = scalar_select %p148, %s13, 7
      %s150 = smul.addr %s149, 8
      %s151 = scalar_lea.vmem %s1, %s150
      %p152 = scmp.lt.s32.totalorder %s13, 1
      %s153 = scalar_select %p152, %s13, 1
      %s154 = smul.addr %s153, 8
      %s155 = scalar_lea.vmem %s2, %s154
      %v156 = vld [vmem:[%s147] sm:$0xff]
      %v157 = vld [vmem:[%s151] sm:$0xff]
      %159 = vrot.lane.b32.xlu0 %v157, 32
      %v160 = vpop.permute.xlu0 %159
      %162 = vrot.lane.b32.xlu0 %v157, 64
      %v163 = vpop.permute.xlu0 %162
      %165 = vrot.lane.b32.xlu0 %v157, 96
      %v166 = vpop.permute.xlu0 %165
      %vm168 = vcmask 261120
      %v169 = vsel %vm168, %v157, %v160
      %vm170 = vcmask 523264
      %v171 = vsel %vm170, %v169, %v163
      %vm172 = vcmask 785408
      %v173 = vsel %vm172, %v171, %v166
      %v174 = vadd.f32 %v156, %v173
      %175 = vst [vmem:[%s155] sm:$0xff] %v174
      %p176 = scmp.lt.s32.totalorder %s13, 1
      %s177 = scalar_select %p176, %s13, 1
      %s178 = smul.addr %s177, 8
      %s179 = scalar_lea.vmem %s2, %s178
      // Predicated region
      $region29: #{positional_encoding_forward.1} parent=27 // pred_check
        %p180 = pneg %p83
      $region30: #{positional_encoding_forward.1} parent=27 // pred_check_branch
        %182 = sbr.rel (%p180) target = $region32
      $region31: #{positional_encoding_forward.1} parent=27 // pred_region
        _
      $region32: #{positional_encoding_forward.1} parent=27 // pred_fallthru
        _
    $region28: #{positional_encoding_forward.1} parent=5 // pred_fallthru
      _
    %p183 = scmp.le.s32.totalorder 2, %s8
    // Predicated region
    $region33: #{positional_encoding_forward.1} parent=5 // pred_check
      %p184 = pneg %p183
    $region34: #{positional_encoding_forward.1} parent=5 // pred_check_branch
      %186 = sbr.rel (%p184) target = $region36
    $region35: #{positional_encoding_forward.1} parent=5 // pred_region
      %s187 = ssub.s32 %s8, 2
      // Predicated region
      $region37: #{positional_encoding_forward.1} parent=35 // pred_check
        %p188 = pneg %p89
      $region38: #{positional_encoding_forward.1} parent=35 // pred_check_branch
        %190 = sbr.rel (%p188) target = $region40
      $region39: #{positional_encoding_forward.1} parent=35 // pred_region
        %p191 = scmp.lt.s32.totalorder %s14, 1
        %s192 = scalar_select %p191, %s14, 1
        %s193 = smul.addr %s192, 8
        %s194 = scalar_lea.vmem %s2, %s193
      $region40: #{positional_encoding_forward.1} parent=35 // pred_fallthru
        _
    $region36: #{positional_encoding_forward.1} parent=5 // pred_fallthru
      _
  $region6: #{positional_encoding_forward.1} parent=0 // loop_footer
    %s12 = sadd.s32 1, %s8
  $region7: #{positional_encoding_forward.1} parent=0 // loop_footer_branch
    %7 = sbr.rel target = $region3
  $region8: #{positional_encoding_forward.1} parent=0 // loop_exit
    _

</llo_original>
